<compile_context>
chip_gen: v6e
topology: v6e:2x2x1
jax: 0.10.0
libtpu: 0.0.40
codegen_flags: <defaults>
</compile_context>

<pallas_src>
import jax
import jax.numpy as jnp
from jax.experimental import pallas as pl
from jax.experimental.pallas import tpu as pltpu


def _drop_path_kernel(scale_ref, x_ref, o_ref):
    # scale_ref: VMEM (TB, 1) per-sample scale.
    # x_ref / o_ref: VMEM (TB, TF) lane-dense tile.
    # One broadcasted multiply over the whole tile (no per-row loop).
    o_ref[...] = x_ref[...] * scale_ref[...]


def vanilla_vit_drop_path(x, key, drop_prob=0.0, training=False):
    """JAX/Pallas equivalent of VanillaViTDropPath.forward / drop_path()."""
    if drop_prob == 0.0 or not training:
        return x

    keep_prob = 1.0 - drop_prob
    orig_shape = x.shape
    B = x.shape[0]
    F = 1
    for d in x.shape[1:]:
        F *= d
    F = max(F, 1)
    x2 = x.reshape(B, F)

    # Per-sample Bernoulli(keep_prob) mask, same recipe as the torch code:
    # floor(keep_prob + rand) in {0, 1}.  Computed in f32, folded with the
    # 1/keep_prob rescale, then cast to x.dtype.  (RNG setup is wrapper glue.)
    rnd = jax.random.uniform(key, (B,), dtype=jnp.float32)
    mask = jnp.floor(jnp.float32(keep_prob) + rnd)
    scale = (mask / jnp.float32(keep_prob)).astype(x.dtype).reshape(B, 1)

    itemsize = jnp.dtype(x.dtype).itemsize
    target_tile_bytes = 8 * 1024 * 1024

    # Feature tile: take the whole row if it fits the tile budget (lane dim ==
    # full array dim satisfies the (8,128) rule); otherwise a 128-aligned
    # chunk of F.  Partial edge tiles are handled by Pallas padding/masking.
    row_bytes = F * itemsize
    if row_bytes <= target_tile_bytes:
        TF = F
    else:
        TF = max(128, (target_tile_bytes // itemsize // 128) * 128)

    # Row tile: as many sublane-aligned rows as fit in the tile budget.
    rows_fit = max(1, target_tile_bytes // max(1, TF * itemsize))
    if rows_fit >= B:
        TB = B                       # whole batch (block == full dim)
    else:
        TB = max(8, (rows_fit // 8) * 8)

    grid = (pl.cdiv(B, TB), pl.cdiv(F, TF))

    out2 = pl.pallas_call(
        _drop_path_kernel,
        out_shape=jax.ShapeDtypeStruct((B, F), x.dtype),
        grid=grid,
        in_specs=[
            pl.BlockSpec((TB, 1), lambda i, j: (i, 0)),    # per-sample scale
            pl.BlockSpec((TB, TF), lambda i, j: (i, j)),   # lane-dense x tile
        ],
        out_specs=pl.BlockSpec((TB, TF), lambda i, j: (i, j)),
        compiler_params=pltpu.CompilerParams(
            # Both grid axes are independent -> shard across the 2 TCs on v7x;
            # measured no-op on single-TC v5e/v6e.
            dimension_semantics=("parallel", "parallel"),
            # Raise the scoped VMEM limit above the v5e(16MiB)/v6e/v7x(32MiB)
            # defaults while staying under v7x's 64 MiB physical VMEM.
            vmem_limit_bytes=48 * 1024 * 1024,
        ),
    )(scale, x2)

    return out2.reshape(orig_shape)
    # TODO(synk): optional scalar-prefetch variant that skips the HBM read for
    # dropped samples (writes zeros under pl.when) — only pays off when
    # B * drop_prob is large.


if __name__ == "__main__":
    key = jax.random.PRNGKey(0)
    k_x, k_drop = jax.random.split(key)

    B, S, D = 2, 8, 32
    x = jax.random.normal(k_x, (B, S, D), dtype=jnp.float32)

    drop_prob = 0.25
    keep_prob = 1.0 - drop_prob

    # Training mode: stochastic-depth masking happens in the Pallas kernel.
    out_train = vanilla_vit_drop_path(x, k_drop, drop_prob=drop_prob, training=True)
    out_train = jax.block_until_ready(out_train)

    # Eval mode (or drop_prob == 0): identity, matching the torch forward.
    out_eval = vanilla_vit_drop_path(x, k_drop, drop_prob=drop_prob, training=False)
    out_eval = jax.block_until_ready(out_eval)

    # Reference check against pure-JAX semantics of drop_path (same RNG recipe
    # and same scale formulation as the kernel path).
    rnd = jax.random.uniform(k_drop, (B,), dtype=jnp.float32)
    scale_ref = jnp.floor(jnp.float32(keep_prob) + rnd) / jnp.float32(keep_prob)
    ref_train = x * scale_ref.astype(x.dtype).reshape(B, 1, 1)

    assert jnp.allclose(out_train, ref_train, atol=1e-6, rtol=1e-6)
    assert jnp.array_equal(out_eval, x)

    print("KERNEL_OK")
</pallas_src>

<mosaic_0001>
module attributes {stable_mosaic.version = 11 : i64} {
  func.func @_drop_path_kernel(%arg0: i32, %arg1: i32, %arg2: memref<2x1xf32, #tpu.memory_space<vmem>>, %arg3: memref<2x256xf32, #tpu.memory_space<vmem>>, %arg4: memref<2x256xf32, #tpu.memory_space<vmem>>) attributes {dimension_semantics = [#tpu.dimension_semantics<parallel>, #tpu.dimension_semantics<parallel>], iteration_bounds = array<i64: 1, 1>, scalar_prefetch = 0 : i64, scratch_operands = 0 : i64, tpu.core_type = #tpu.core_type<tc>, window_params = [{transform_indices = @transform_0, window_bounds = array<i64: 2, 1>}, {transform_indices = @transform_1, window_bounds = array<i64: 2, 256>}, {transform_indices = @transform_2, window_bounds = array<i64: 2, 256>}]} {
    %c0 = arith.constant 0 : index
    %c0_0 = arith.constant 0 : index
    %0 = vector.load %arg3[%c0, %c0_0] : memref<2x256xf32, #tpu.memory_space<vmem>>, vector<2x256xf32>
    %c0_1 = arith.constant 0 : index
    %c0_2 = arith.constant 0 : index
    %1 = vector.load %arg2[%c0_1, %c0_2] : memref<2x1xf32, #tpu.memory_space<vmem>>, vector<2x1xf32>
    %2 = vector.broadcast %1 : vector<2x1xf32> to vector<2x256xf32>
    %3 = arith.mulf %0, %2 : vector<2x256xf32>
    %c0_3 = arith.constant 0 : index
    %c0_4 = arith.constant 0 : index
    %4 = vector.load %arg4[%c0_3, %c0_4] : memref<2x256xf32, #tpu.memory_space<vmem>>, vector<2x256xf32>
    tpu.vector_store %arg4[%c0_3, %c0_4], %3 {strides = array<i32>} : memref<2x256xf32, #tpu.memory_space<vmem>>, vector<2x256xf32>,
    return
  }
  func.func @transform_0(%arg0: i32, %arg1: i32) -> (i32, i32) {
    %c0_i32 = arith.constant 0 : i32
    %c0_i32_0 = arith.constant 0 : i32
    return %arg0, %c0_i32 : i32, i32
  }
  func.func @transform_1(%arg0: i32, %arg1: i32) -> (i32, i32) {
    %c0_i32 = arith.constant 0 : i32
    return %arg0, %arg1 : i32, i32
  }
  func.func @transform_2(%arg0: i32, %arg1: i32) -> (i32, i32) {
    %c0_i32 = arith.constant 0 : i32
    return %arg0, %arg1 : i32, i32
  }
}

</mosaic_0001>

<llo_original>
// kernel: tpu_custom_call.1
$region0: #{tpu_custom_call.1}
  #allocation0 [shape = 'u32[]', space=smem, size = 0x4, offset = 0x4, fixed_abs, tag = 'smem constant byte address 0x4 - core index']
  #allocation1 [shape = 'u32[144,128]{1,0:T(1,128)}', space=vmem, size = 0x12000, scoped, tag = 'internal scratch']
  %s0 = inlined_call_operand.vmem [shape: f32[2,1], index: 0, kind: input, shape index: {}]
  %s1 = inlined_call_operand.vmem [shape: f32[2,256], index: 1, kind: input, shape index: {}]
  %s2 = inlined_call_operand.hbm [shape: f32[2,256], index: 2, kind: output, shape index: {}]
  %s3 = sld [smem:[#allocation0]]
  $region18: #{tpu_custom_call.1} parent=0
    _
  %s5 = ssub.s32 1, %s3
  %s6 = scalar_select 0, %s5, %s3
  $region1: #{tpu_custom_call.1} parent=0
    #allocation2 [shape = 'u8[2048]{0}', space=vmem, size = 0x800, scoped, tag = 'output window, operand 0, single buffered']
    #allocation3 [shape = 's32[1]{0}', space=sflag, size = 0x4, scoped, tag = 'scoped memory for tpu_custom_call.1']
    %7 = vsyncpa [#allocation3], 0
    // Predicated region
    $region2: #{tpu_custom_call.1} parent=1 // pred_check
      _
    $region3: #{tpu_custom_call.1} parent=1 // pred_check_branch
      %9 = sbr.rel (0) target = $region5
    $region4: #{tpu_custom_call.1} parent=1 // pred_region
      _
    $region5: #{tpu_custom_call.1} parent=1 // pred_fallthru
      _
    // Predicated region
    $region6: #{tpu_custom_call.1} parent=1 // pred_check
      _
    $region7: #{tpu_custom_call.1} parent=1 // pred_check_branch
      %11 = sbr.rel (0) target = $region9
    $region8: #{tpu_custom_call.1} parent=1 // pred_region
      _
    $region9: #{tpu_custom_call.1} parent=1 // pred_fallthru
      _
    %v12 = vld [vmem:[%s1] sm:$0xf]
    %v13 = vld [vmem:[%s0] sm:$0x3]
    %15 = vset.pattern.permute.xlu0 0
    %16 = vperm.xlu0 %15, %v13
    %v17 = vpop.permute.xlu0 %16
    %v19 = vunpack.c.l.s4 269488144
    %v20 = vunpack.c.0.s8 %v19
    %v21 = vlaneseq
    %v22 = vshrl.u32 %v21, 7
    %v23 = vsub.s32 %v20, %v22
    %v24 = vrot.slane %v17, %v23
    %v26 = vmul.f32 %v12, %v24
    %27 = vst [vmem:[#allocation2] sm:$0xf] %v26
    // Predicated region
    $region10: #{tpu_custom_call.1} parent=1 // pred_check
      _
    $region11: #{tpu_custom_call.1} parent=1 // pred_check_branch
      %29 = sbr.rel (0) target = $region13
    $region12: #{tpu_custom_call.1} parent=1 // pred_region
      %s31 = ssub.s32 64, 64
      %32 = vsyncadd [#allocation3], %s31
      %s34 = sshll.u32 [#allocation2], 4
      %s35 = int_to_ptr.vmem [resolvable:$true] %s34
      %37 = dma.vmem_to_hbm [thread:$0]  %s35, 64, %s2, [#allocation3]
    $region13: #{tpu_custom_call.1} parent=1 // pred_fallthru
      _
    // Predicated region
    $region14: #{tpu_custom_call.1} parent=1 // pred_check
      _
    $region15: #{tpu_custom_call.1} parent=1 // pred_check_branch
      %39 = sbr.rel (0) target = $region17
    $region16: #{tpu_custom_call.1} parent=1 // pred_region
      %40 = dma.done [#allocation3], 64
    $region17: #{tpu_custom_call.1} parent=1 // pred_fallthru
      _
    %41 = vsyncpa [#allocation3], 1

</llo_original>
